<compile_context>
chip_gen: v6e
topology: v6e:2x2x1
jax: 0.10.0
libtpu: 0.0.40
codegen_flags: <defaults>
</compile_context>

<pallas_src>
import jax
import jax.numpy as jnp
from jax.experimental import pallas as pl
from jax.experimental.pallas import tpu as pltpu


def _round_up(v, m):
    return ((v + m - 1) // m) * m


def linear_kernel(x_ref, w_ref, b_ref, o_ref):
    # One MXU matmul with f32 accumulation + broadcast bias add, all in VMEM.
    acc = jnp.dot(x_ref[...], w_ref[...], preferred_element_type=jnp.float32)
    o_ref[...] = (acc + b_ref[...]).astype(o_ref.dtype)


def prepare_params(w, b):
    """One-time parameter preparation (hoisted out of the per-call forward).

    w: (D_out, D_in)  PyTorch nn.Linear weight layout
    b: (D_out,)
    returns (w_t, b2d) with w_t: (D_in, D_out), b2d: (1, D_out)
    """
    w_t = jnp.asarray(w).T
    b2d = jnp.asarray(b).reshape(1, -1)
    return w_t, b2d


def softmax_module_forward(x, w_t, b2d, *, batch_tile=2048, small_batch_max=256):
    """Forward of the `SoftMax` module (a plain linear layer): x @ W^T + b.

    x:   (B, D_in)    f32
    w_t: (D_in, D_out) f32  (pre-transposed once by prepare_params)
    b2d: (1, D_out)    f32
    returns (B, D_out) f32
    """
    B, D_in = x.shape
    D_out = w_t.shape[1]
    itemsize = jnp.dtype(x.dtype).itemsize

    cost = pl.CostEstimate(
        flops=2 * B * D_in * D_out,
        transcendentals=0,
        bytes_accessed=itemsize * (B * D_in + D_in * D_out + D_out + B * D_out),
    )

    w_bytes = itemsize * (D_in * D_out + D_out)

    if B <= max(small_batch_max, 8):
        # Small / overhead-bound case: no grid, whole operands resident in VMEM,
        # a single kernel invocation and a single MXU call.
        footprint = itemsize * (B * D_in + B * D_out) + w_bytes
        vmem_limit = min(max(2 * footprint, 4 << 20), 48 << 20)
        return pl.pallas_call(
            linear_kernel,
            out_shape=jax.ShapeDtypeStruct((B, D_out), x.dtype),
            in_specs=[pl.BlockSpec(memory_space=pltpu.MemorySpace.VMEM)] * 3,
            out_specs=pl.BlockSpec(memory_space=pltpu.MemorySpace.VMEM),
            compiler_params=pltpu.CompilerParams(vmem_limit_bytes=vmem_limit),
            cost_estimate=cost,
        )(x, w_t, b2d)

    # Grid path: tile rows, keep W / bias whole (constant index_map).
    # Cap the tile so double-buffered x/out tiles + resident W stay within a
    # conservative VMEM budget (safe on every generation incl. v7x 64 MiB).
    vmem_budget = 24 << 20
    bytes_per_row = 2 * (D_in + D_out) * itemsize          # double-buffered x + out
    max_tile_rows = max(8, (vmem_budget - 2 * w_bytes) // bytes_per_row)
    max_tile_rows = (max_tile_rows // 8) * 8
    # Aim for >= 2 grid steps so v7x can shard the batch across both TensorCores.
    tile = min(batch_tile, max_tile_rows, _round_up(pl.cdiv(B, 2), 8))
    tile = max(tile, 8)

    grid_steps = pl.cdiv(B, tile)                          # partial last tile is masked
    step_bytes = 2 * tile * (D_in + D_out) * itemsize
    vmem_limit = min(max(2 * (step_bytes + 2 * w_bytes), 8 << 20), 48 << 20)

    return pl.pallas_call(
        linear_kernel,
        out_shape=jax.ShapeDtypeStruct((B, D_out), x.dtype),
        grid=(grid_steps,),
        in_specs=[
            pl.BlockSpec((tile, D_in), lambda i: (i, 0)),
            pl.BlockSpec((D_in, D_out), lambda i: (0, 0)),
            pl.BlockSpec((1, D_out), lambda i: (0, 0)),
        ],
        out_specs=pl.BlockSpec((tile, D_out), lambda i: (i, 0)),
        compiler_params=pltpu.CompilerParams(
            dimension_semantics=("parallel",),
            vmem_limit_bytes=vmem_limit,
        ),
        cost_estimate=cost,
    )(x, w_t, b2d)


if __name__ == "__main__":
    # Small shapes consistent with the module (flattened-digit-image classifier).
    batch = 8
    input_size = 64
    output_size = 10

    key = jax.random.PRNGKey(0)
    kx, kw, kb, kx2 = jax.random.split(key, 4)

    # Deterministic parameter init mirroring nn.Linear's default
    # uniform(-1/sqrt(in), 1/sqrt(in)); weight kept in PyTorch (out, in) layout.
    bound = 1.0 / (input_size ** 0.5)
    w = jax.random.uniform(kw, (output_size, input_size), jnp.float32, -bound, bound)
    b = jax.random.uniform(kb, (output_size,), jnp.float32, -bound, bound)
    x = jax.random.normal(kx, (batch, input_size), jnp.float32)

    # One-time parameter prep (hoisted out of the per-call forward).
    w_t, b2d = prepare_params(w, b)

    ref = x @ w.T + b

    # Path 1: small batch -> gridless single-invocation kernel.
    out = jax.block_until_ready(softmax_module_forward(x, w_t, b2d))
    assert out.shape == (batch, output_size)
    assert jnp.allclose(out, ref, atol=1e-5, rtol=1e-5)

    # Path 2: batch-tiled grid path with a non-divisible batch (exercises the
    # masked partial trailing tile — no x-padding copy, no output slice).
    x_big = jax.random.normal(kx2, (20, input_size), jnp.float32)
    ref_big = x_big @ w.T + b
    out_big = jax.block_until_ready(
        softmax_module_forward(x_big, w_t, b2d, batch_tile=8, small_batch_max=4)
    )
    assert out_big.shape == (20, output_size)
    assert jnp.allclose(out_big, ref_big, atol=1e-5, rtol=1e-5)

    print("KERNEL_OK")
</pallas_src>

<mosaic_0001>
module attributes {stable_mosaic.version = 11 : i64} {
  func.func @linear_kernel(%arg0: memref<8x64xf32, #tpu.memory_space<vmem>>, %arg1: memref<64x10xf32, #tpu.memory_space<vmem>>, %arg2: memref<1x10xf32, #tpu.memory_space<vmem>>, %arg3: memref<8x10xf32, #tpu.memory_space<vmem>>) attributes {dimension_semantics = [], scalar_prefetch = 0 : i64, scratch_operands = 0 : i64, tpu.core_type = #tpu.core_type<tc>} {
    %c0 = arith.constant 0 : index
    %c0_0 = arith.constant 0 : index
    %0 = vector.load %arg0[%c0, %c0_0] : memref<8x64xf32, #tpu.memory_space<vmem>>, vector<8x64xf32>
    %c0_1 = arith.constant 0 : index
    %c0_2 = arith.constant 0 : index
    %1 = vector.load %arg1[%c0_1, %c0_2] : memref<64x10xf32, #tpu.memory_space<vmem>>, vector<64x10xf32>
    %cst = arith.constant dense<0.000000e+00> : vector<8x10xf32>
    %2 = tpu.matmul %0, %1, %cst {dimension_numbers = #tpu.dot_dimension_numbers<[1], [0], [0], [1], [0, 0, 1, 1], [], []>} : vector<8x64xf32>, vector<64x10xf32>, vector<8x10xf32> -> vector<8x10xf32>
    %c0_3 = arith.constant 0 : index
    %c0_4 = arith.constant 0 : index
    %3 = vector.load %arg2[%c0_3, %c0_4] : memref<1x10xf32, #tpu.memory_space<vmem>>, vector<1x10xf32>
    %4 = vector.broadcast %3 : vector<1x10xf32> to vector<8x10xf32>
    %5 = arith.addf %2, %4 : vector<8x10xf32>
    %c0_5 = arith.constant 0 : index
    %c0_6 = arith.constant 0 : index
    %6 = vector.load %arg3[%c0_5, %c0_6] : memref<8x10xf32, #tpu.memory_space<vmem>>, vector<8x10xf32>
    tpu.vector_store %arg3[%c0_5, %c0_6], %5 {strides = array<i32>} : memref<8x10xf32, #tpu.memory_space<vmem>>, vector<8x10xf32>,
    return
  }
}

</mosaic_0001>

<llo_original>
// kernel: tpu_custom_call.1
$region0: #{tpu_custom_call.1}
  #allocation0 [shape = 'u32[]', space=smem, size = 0x4, offset = 0x4, fixed_abs, tag = 'smem constant byte address 0x4 - core index']
  #allocation1 [shape = 'u32[144,128]{1,0:T(1,128)}', space=vmem, size = 0x12000, scoped, tag = 'internal scratch']
  %s0 = inlined_call_operand.vmem [shape: f32[8,64], index: 0, kind: input, shape index: {}]
  %s1 = inlined_call_operand.vmem [shape: f32[64,10], index: 1, kind: input, shape index: {}]
  %s2 = inlined_call_operand.vmem [shape: f32[1,10], index: 2, kind: input, shape index: {}]
  %s3 = inlined_call_operand.hbm [shape: f32[8,10], index: 3, kind: output, shape index: {}]
  %s4 = sld [smem:[#allocation0]]
  $region22: #{tpu_custom_call.1} parent=0
    _
  %s6 = ssub.s32 1, %s4
  %s7 = scalar_select 0, %s6, %s4
  $region1: #{tpu_custom_call.1} parent=0
    #allocation2 [shape = 'u8[4096]{0}', space=vmem, size = 0x1000, scoped, tag = 'output window, operand 0, single buffered']
    #allocation3 [shape = 's32[1]{0}', space=sflag, size = 0x4, scoped, tag = 'scoped memory for tpu_custom_call.1']
    %8 = vsyncpa [#allocation3], 0
    // Predicated region
    $region2: #{tpu_custom_call.1} parent=1 // pred_check
      _
    $region3: #{tpu_custom_call.1} parent=1 // pred_check_branch
      %10 = sbr.rel (0) target = $region5
    $region4: #{tpu_custom_call.1} parent=1 // pred_region
      _
    $region5: #{tpu_custom_call.1} parent=1 // pred_fallthru
      _
    // Predicated region
    $region6: #{tpu_custom_call.1} parent=1 // pred_check
      _
    $region7: #{tpu_custom_call.1} parent=1 // pred_check_branch
      %12 = sbr.rel (0) target = $region9
    $region8: #{tpu_custom_call.1} parent=1 // pred_region
      _
    $region9: #{tpu_custom_call.1} parent=1 // pred_fallthru
      _
    // Predicated region
    $region10: #{tpu_custom_call.1} parent=1 // pred_check
      _
    $region11: #{tpu_custom_call.1} parent=1 // pred_check_branch
      %14 = sbr.rel (0) target = $region13
    $region12: #{tpu_custom_call.1} parent=1 // pred_region
      _
    $region13: #{tpu_custom_call.1} parent=1 // pred_fallthru
      _
    %v15 = vld [vmem:[%s0] sm:$0xff]
    %v16 = vld [vmem:[%s1] sm:$0xff]
    %v17 = vld [vmem:[%s1 + $0x8] sm:$0xff]
    %v18 = vld [vmem:[%s1 + $0x10] sm:$0xff]
    %v19 = vld [vmem:[%s1 + $0x18] sm:$0xff]
    %v20 = vld [vmem:[%s1 + $0x20] sm:$0xff]
    %v21 = vld [vmem:[%s1 + $0x28] sm:$0xff]
    %v22 = vld [vmem:[%s1 + $0x30] sm:$0xff]
    %v23 = vld [vmem:[%s1 + $0x38] sm:$0xff]
    %v24 = vld [vmem:[%s2] sm:$0x1]
    %v26 = vlaneseq
    %v27 = vshrl.u32 %v26, 7
    %v28 = vsub.s32 0, %v27
    %v29 = vrot.slane %v24, %v28
    %vm31 = vcmask 523264
    %v33 = vsel %vm31, %v15, 0
    %35 = vmatprep.subr.mxu0 0.0
    %36 = vmatpush1.msra.mxu0 0.0
    %37 = vmatprep.subr.mxu0 0.0
    %38 = vmatpush1.msra.mxu0 0.0
    %39 = vmatprep.subr.mxu0 0.0
    %40 = vmatpush1.msra.mxu0 0.0
    %41 = vmatprep.subr.mxu0 0.0
    %42 = vmatpush1.msra.mxu0 0.0
    %43 = vmatprep.subr.mxu0 0.0
    %44 = vmatpush1.msra.mxu0 0.0
    %45 = vmatprep.subr.mxu0 0.0
    %46 = vmatpush1.msra.mxu0 0.0
    %47 = vmatprep.subr.mxu0 0.0
    %48 = vmatpush1.msra.mxu0 0.0
    %49 = vmatprep.subr.mxu0 0.0
    %50 = vmatpush1.msra.mxu0 0.0
    %51 = vmatprep.subr.mxu0 0.0
    %52 = vmatpush1.msra.mxu0 %v23
    %53 = vmatprep.subr.mxu0 0.0
    %54 = vmatpush1.msra.mxu0 %v22
    %55 = vmatprep.subr.mxu0 0.0
    %56 = vmatpush1.msra.mxu0 %v21
    %57 = vmatprep.subr.mxu0 0.0
    %58 = vmatpush1.msra.mxu0 %v20
    %59 = vmatprep.subr.mxu0 0.0
    %60 = vmatpush1.msra.mxu0 %v19
    %61 = vmatprep.subr.mxu0 0.0
    %62 = vmatpush1.msra.mxu0 %v18
    %63 = vmatprep.subr.mxu0 0.0
    %64 = vmatpush1.msra.mxu0 %v17
    %65 = vmatprep.subr.mxu0 0.0
    %66 = vmatpush1.msra.mxu0 %v16
    %67 = vmatprep.subr.mxu0 0.0
    %68 = vmatpush2.msra.mxu0 0.0
    %69 = vmatprep.subr.mxu0 0.0
    %70 = vmatpush2.msra.mxu0 0.0
    %71 = vmatprep.subr.mxu0 0.0
    %72 = vmatpush2.msra.mxu0 0.0
    %73 = vmatprep.subr.mxu0 0.0
    %74 = vmatpush2.msra.mxu0 0.0
    %75 = vmatprep.subr.mxu0 0.0
    %76 = vmatpush2.msra.mxu0 0.0
    %77 = vmatprep.subr.mxu0 0.0
    %78 = vmatpush2.msra.mxu0 0.0
    %79 = vmatprep.subr.mxu0 0.0
    %80 = vmatpush2.msra.mxu0 0.0
    %81 = vmatprep.subr.mxu0 0.0
    %82 = vmatpush2.msra.mxu0 0.0
    %83 = vmatprep.subr.mxu0 0.0
    %84 = vmatpush2.msra.mxu0 0.0
    %85 = vmatprep.subr.mxu0 0.0
    %86 = vmatpush2.msra.mxu0 0.0
    %87 = vmatprep.subr.mxu0 0.0
    %88 = vmatpush2.msra.mxu0 0.0
    %89 = vmatprep.subr.mxu0 0.0
    %90 = vmatpush2.msra.mxu0 0.0
    %91 = vmatprep.subr.mxu0 0.0
    %92 = vmatpush2.msra.mxu0 0.0
    %93 = vmatprep.subr.mxu0 0.0
    %94 = vmatpush2.msra.mxu0 0.0
    %95 = vmatprep.subr.mxu0 0.0
    %96 = vmatpush2.msra.mxu0 0.0
    %97 = vmatprep.subr.mxu0 0.0
    %98 = vmatpush2.msra.mxu0 0.0
    %99 = vmatprep.mubr.f32.mxu0 0.0
    %100 = vmatmul.mubr.f32.gmra.mxu0 %v33
    %v101 = vpop.f32.mrf.mxu0
    %v102 = vadd.f32 %v29, %v101
    %v103 = vpop.f32.mrf.mxu0
    %104 = vdwg.mxu0
    %vm105 = vcmask 80896
    %106 = vst.msk [vmem:[#allocation2] sm:$0xff] %vm105, %v102
    // Predicated region
    $region14: #{tpu_custom_call.1} parent=1 // pred_check
      _
    $region15: #{tpu_custom_call.1} parent=1 // pred_check_branch
      %108 = sbr.rel (0) target = $region17
    $region16: #{tpu_custom_call.1} parent=1 // pred_region
      %s110 = ssub.s32 128, 128
      %111 = vsyncadd [#allocation3], %s110
      %s113 = sshll.u32 [#allocation2], 4
      %s114 = int_to_ptr.vmem [resolvable:$true] %s113
      %116 = dma.vmem_to_hbm [thread:$0]  %s114, 128, %s3, [#allocation3]
    $region17: #{tpu_custom_call.1} parent=1 // pred_fallthru
      _
    // Predicated region
    $region18: #{tpu_custom_call.1} parent=1 // pred_check
      _
    $region19: #{tpu_custom_call.1} parent=1 // pred_check_branch
      %118 = sbr.rel (0) target = $region21
    $region20: #{tpu_custom_call.1} parent=1 // pred_region
      %119 = dma.done [#allocation3], 128
    $region21: #{tpu_custom_call.1} parent=1 // pred_fallthru
      _
    %120 = vsyncpa [#allocation3], 1

</llo_original>
